<compile_context>
chip_gen: v6e
topology: v6e:2x2x1
jax: 0.10.0
libtpu: 0.0.40
codegen_flags: <defaults>
</compile_context>

<pallas_src>
import math
import functools

import jax
import jax.numpy as jnp
from jax.experimental import pallas as pl
from jax.experimental.pallas import tpu as pltpu


# ---------------------------------------------------------------------------
# Kernel: elementwise activation on one VMEM tile.
# The activation choice is a static Python string baked in at trace time.
# ---------------------------------------------------------------------------
def _activation_kernel(x_ref, o_ref, *, hidden_act):
    x = x_ref[...]  # keep input dtype (no blanket f32 upcast)
    act = hidden_act.lower()
    if act == "relu":
        y = jnp.maximum(x, 0.0)
    elif act == "tanh":
        y = jnp.tanh(x)
    elif act == "swish":
        # x * sigmoid(x)
        y = x * jax.nn.sigmoid(x)
    elif act == "gelu":
        # gelu_new (tanh approximation), matching the PyTorch module:
        # 0.5 * x * (1 + tanh(sqrt(2/pi) * (x + 0.044715 * x^3)))
        c = math.sqrt(2.0 / math.pi)
        y = 0.5 * x * (1.0 + jnp.tanh(c * (x + 0.044715 * (x * x * x))))
    elif act == "leakyrelu":
        # torch default negative_slope = 0.01
        y = jnp.where(x >= 0, x, 0.01 * x)
    else:
        raise ValueError(f"unsupported activation: {hidden_act}")
    o_ref[...] = y.astype(o_ref.dtype)


# ---------------------------------------------------------------------------
# Wrapper
# ---------------------------------------------------------------------------
def activation_forward(x, hidden_act, *, target_block_bytes=2 * 1024 * 1024):
    """Apply the activation elementwise via a Pallas TPU kernel.

    x: any shape. The array is flattened and re-viewed as a lane-dense
    (rows, C) slab (C a multiple of 128), then tiled into ~2 MiB blocks.
    """
    orig_shape = x.shape
    dtype = x.dtype
    n = x.size
    if n == 0:
        return x
    dtype_bytes = jnp.dtype(dtype).itemsize

    # ---- choose a lane-dense column width C (multiple of 128, <= 2048) -----
    C = None
    for cand in range(2048, 127, -128):
        if n % cand == 0:
            C = cand
            break

    flat = x.reshape(-1)
    if C is None:
        # No multiple-of-128 divisor: pad the flat array (rare; small overhead).
        C = 2048 if n >= 2048 else max(128, -(-n // 128) * 128)
        n_pad = -(-n // C) * C
        flat = jnp.pad(flat, (0, n_pad - n))
    else:
        n_pad = n

    rows = n_pad // C
    x2d = flat.reshape(rows, C)

    # ---- row tile: ~target_block_bytes per block, multiple of 8 sublanes ---
    target_rows = max(8, (target_block_bytes // (C * dtype_bytes)) // 8 * 8)
    row_tile = rows if rows <= target_rows else target_rows

    grid = (pl.cdiv(rows, row_tile),)
    kernel = functools.partial(_activation_kernel, hidden_act=hidden_act)

    out2d = pl.pallas_call(
        kernel,
        out_shape=jax.ShapeDtypeStruct((rows, C), dtype),
        grid_spec=pltpu.PrefetchScalarGridSpec(
            num_scalar_prefetch=0,
            grid=grid,
            in_specs=[pl.BlockSpec((row_tile, C), lambda i: (i, 0))],
            out_specs=pl.BlockSpec((row_tile, C), lambda i: (i, 0)),
        ),
        compiler_params=pltpu.CompilerParams(
            dimension_semantics=("parallel",),
            # ~2 MiB block x (2 in + 2 out) double buffers ~= 8 MiB; 32 MiB is
            # safe on v5e/v6e/v7x and leaves headroom.
            vmem_limit_bytes=32 * 1024 * 1024,
        ),
    )(x2d)

    out_flat = out2d.reshape(-1)
    if n_pad != n:
        out_flat = out_flat[:n]
    return out_flat.reshape(orig_shape)


# ---------------------------------------------------------------------------
# Reference (pure JAX) for correctness check
# ---------------------------------------------------------------------------
def _reference(x, hidden_act):
    x = x.astype(jnp.float32)
    act = hidden_act.lower()
    if act == "relu":
        return jnp.maximum(x, 0.0)
    if act == "tanh":
        return jnp.tanh(x)
    if act == "swish":
        return x * jax.nn.sigmoid(x)
    if act == "gelu":
        c = math.sqrt(2.0 / math.pi)
        return 0.5 * x * (1.0 + jnp.tanh(c * (x + 0.044715 * x ** 3)))
    if act == "leakyrelu":
        return jnp.where(x >= 0.0, x, 0.01 * x)
    raise ValueError(hidden_act)


if __name__ == "__main__":
    key = jax.random.PRNGKey(0)
    # batch=2, seq=8, hidden=32 (a transformer adapter hidden state)
    x = jax.random.normal(key, (2, 8, 32), dtype=jnp.float32)

    ok = True
    for act in ["relu", "tanh", "swish", "gelu", "leakyrelu"]:
        y = activation_forward(x, act)
        y = jax.block_until_ready(y)
        y_ref = _reference(x, act)
        if not jnp.allclose(y, y_ref, atol=1e-5, rtol=1e-5):
            ok = False
            print(f"MISMATCH for activation {act}")

    # Also exercise the lane-dense reshaped path with a larger shape.
    x_big = jax.random.normal(jax.random.PRNGKey(1), (4, 16, 128), dtype=jnp.float32)
    y_big = jax.block_until_ready(activation_forward(x_big, "gelu"))
    if not jnp.allclose(y_big, _reference(x_big, "gelu"), atol=1e-5, rtol=1e-5):
        ok = False
        print("MISMATCH for tiled gelu path")

    # And a non-128-divisible element count (exercises the pad fallback).
    x_odd = jax.random.normal(jax.random.PRNGKey(2), (3, 5, 7), dtype=jnp.float32)
    y_odd = jax.block_until_ready(activation_forward(x_odd, "swish"))
    if not jnp.allclose(y_odd, _reference(x_odd, "swish"), atol=1e-5, rtol=1e-5):
        ok = False
        print("MISMATCH for padded swish path")

    if ok:
        print("KERNEL_OK")
</pallas_src>

<mosaic_0001>
module attributes {stable_mosaic.version = 11 : i64} {
  func.func @_activation_kernel(%arg0: i32, %arg1: memref<1x512xf32, #tpu.memory_space<vmem>>, %arg2: memref<1x512xf32, #tpu.memory_space<vmem>>) attributes {dimension_semantics = [#tpu.dimension_semantics<parallel>], iteration_bounds = array<i64: 1>, scalar_prefetch = 0 : i64, scratch_operands = 0 : i64, tpu.core_type = #tpu.core_type<tc>, window_params = [{transform_indices = @transform_0, window_bounds = array<i64: 1, 512>}, {transform_indices = @transform_1, window_bounds = array<i64: 1, 512>}]} {
    %c0 = arith.constant 0 : index
    %c0_0 = arith.constant 0 : index
    %0 = vector.load %arg1[%c0, %c0_0] : memref<1x512xf32, #tpu.memory_space<vmem>>, vector<1x512xf32>
    %cst = arith.constant 0.000000e+00 : f32
    %1 = vector.broadcast %cst : f32 to vector<1x512xf32>
    %2 = arith.maximumf %0, %1 : vector<1x512xf32>
    %c0_1 = arith.constant 0 : index
    %c0_2 = arith.constant 0 : index
    %3 = vector.load %arg2[%c0_1, %c0_2] : memref<1x512xf32, #tpu.memory_space<vmem>>, vector<1x512xf32>
    tpu.vector_store %arg2[%c0_1, %c0_2], %2 {strides = array<i32>} : memref<1x512xf32, #tpu.memory_space<vmem>>, vector<1x512xf32>,
    return
  }
  func.func @transform_0(%arg0: i32) -> (i32, i32) {
    %c0_i32 = arith.constant 0 : i32
    %c0_i32_0 = arith.constant 0 : i32
    return %arg0, %c0_i32 : i32, i32
  }
  func.func @transform_1(%arg0: i32) -> (i32, i32) {
    %c0_i32 = arith.constant 0 : i32
    %c0_i32_0 = arith.constant 0 : i32
    return %arg0, %c0_i32 : i32, i32
  }
}

</mosaic_0001>

<llo_original>
// kernel: tpu_custom_call.1
$region0: #{tpu_custom_call.1}
  #allocation0 [shape = 'u32[]', space=smem, size = 0x4, offset = 0x4, fixed_abs, tag = 'smem constant byte address 0x4 - core index']
  #allocation1 [shape = 'u32[144,128]{1,0:T(1,128)}', space=vmem, size = 0x12000, scoped, tag = 'internal scratch']
  %s0 = inlined_call_operand.hbm [shape: f32[1,512], index: 0, kind: input, shape index: {}]
  %s1 = inlined_call_operand.hbm [shape: f32[1,512], index: 1, kind: output, shape index: {}]
  %s2 = sld [smem:[#allocation0]]
  $region18: #{tpu_custom_call.1} parent=0
    _
  %s4 = ssub.s32 1, %s2
  %s5 = scalar_select 0, %s4, %s2
  $region1: #{tpu_custom_call.1} parent=0
    #allocation2 [shape = 'u8[2048]{0}', space=vmem, size = 0x800, scoped, tag = 'input window, operand 0, single buffered']
    #allocation3 [shape = 's32[1]{0}', space=sflag, size = 0x4, scoped, tag = 'scoped memory for tpu_custom_call.1']
    #allocation4 [shape = 's32[1]{0}', space=sflag, size = 0x4, scoped, tag = 'scoped memory for tpu_custom_call.1']
    #allocation5 [shape = 'u8[2048]{0}', space=vmem, size = 0x800, scoped, tag = 'output window, operand 0, single buffered']
    %6 = vsyncpa [#allocation3], 0
    %7 = vsyncpa [#allocation4], 0
    // Predicated region
    $region2: #{tpu_custom_call.1} parent=1 // pred_check
      _
    $region3: #{tpu_custom_call.1} parent=1 // pred_check_branch
      %9 = sbr.rel (0) target = $region5
    $region4: #{tpu_custom_call.1} parent=1 // pred_region
      %s11 = ssub.s32 64, 64
      %12 = vsyncadd [#allocation3], %s11
      %s14 = sshll.u32 [#allocation2], 4
      %s15 = int_to_ptr.vmem [resolvable:$true] %s14
      %17 = dma.hbm_to_vmem [thread:$0]  %s0, 64, %s15, [#allocation3]
    $region5: #{tpu_custom_call.1} parent=1 // pred_fallthru
      _
    // Predicated region
    $region6: #{tpu_custom_call.1} parent=1 // pred_check
      _
    $region7: #{tpu_custom_call.1} parent=1 // pred_check_branch
      %19 = sbr.rel (0) target = $region9
    $region8: #{tpu_custom_call.1} parent=1 // pred_region
      %20 = dma.done [#allocation3], 64
    $region9: #{tpu_custom_call.1} parent=1 // pred_fallthru
      _
    %v21 = vld [vmem:[#allocation2] sm:$0xf]
    %v22 = vmax.f32 %v21, 0.0
    %v23 = vlaneseq
    %vm24 = vcmp.ge.s32.totalorder %v23, 0
    %vm25 = vcmp.lt.s32.totalorder %v23, 512
    %vm26 = vmand %vm24, %vm25
    %27 = vst.msk [vmem:[#allocation5] sm:$0xf] %vm26, %v22
    // Predicated region
    $region10: #{tpu_custom_call.1} parent=1 // pred_check
      _
    $region11: #{tpu_custom_call.1} parent=1 // pred_check_branch
      %29 = sbr.rel (0) target = $region13
    $region12: #{tpu_custom_call.1} parent=1 // pred_region
      %s31 = ssub.s32 64, 64
      %32 = vsyncadd [#allocation4], %s31
      %s34 = sshll.u32 [#allocation5], 4
      %s35 = int_to_ptr.vmem [resolvable:$true] %s34
      %37 = dma.vmem_to_hbm [thread:$0]  %s35, 64, %s1, [#allocation4]
    $region13: #{tpu_custom_call.1} parent=1 // pred_fallthru
      _
    // Predicated region
    $region14: #{tpu_custom_call.1} parent=1 // pred_check
      _
    $region15: #{tpu_custom_call.1} parent=1 // pred_check_branch
      %39 = sbr.rel (0) target = $region17
    $region16: #{tpu_custom_call.1} parent=1 // pred_region
      %40 = dma.done [#allocation4], 64
    $region17: #{tpu_custom_call.1} parent=1 // pred_fallthru
      _
    %41 = vsyncpa [#allocation3], 1
    %42 = vsyncpa [#allocation4], 1

</llo_original>
